<compile_context>
chip_gen: v7x
topology: tpu7x:2x2x1
jax: 0.10.0
libtpu: 0.0.40
codegen_flags: <defaults>
</compile_context>

<pallas_src>
import functools

import jax
import jax.numpy as jnp
from jax.experimental import pallas as pl
from jax.experimental.pallas import tpu as pltpu


def _rmsnorm_kernel(x_ref, w_ref, o_ref, *, eps):
    # x_ref: (tm, H) tile of input rows, w_ref: (1, H) weight.
    x = x_ref[...].astype(jnp.float32)                     # .to(torch.float32)
    var = jnp.mean(x * x, axis=-1, keepdims=True)          # pow(2).mean(-1, keepdim)
    hs = x * jax.lax.rsqrt(var + eps)                      # x * rsqrt(var + eps)
    hs = hs.astype(x_ref.dtype)                            # .to(input_dtype) (PyTorch-exact)
    # weight * hs; result dtype follows promotion (== o_ref dtype), as in torch.
    o_ref[...] = (w_ref[...] * hs).astype(o_ref.dtype)


def _vmem_capacity_bytes():
    """Physical VMEM per TensorCore; conservative fallback if query fails."""
    try:
        info = pltpu.get_tpu_info()
        cap = getattr(info, "vmem_capacity_bytes", None)
        if cap:
            return int(cap)
    except Exception:
        pass
    return 64 * 1024 * 1024  # v7x per-TC VMEM; safe lower bound for all gens.


def _pick_block_rows(rows, H, in_bytes, out_bytes, vmem_cap):
    # Sublane packing: f32 -> 8 rows / vreg, bf16 -> 16, int8/fp8 -> 32.
    row_align = max(8, 32 // in_bytes)
    # Keep double-buffered (input + output) tiles within ~half of physical VMEM.
    per_row_buffered = 2 * H * (in_bytes + out_bytes)
    max_by_vmem = max(row_align, (vmem_cap // 2) // per_row_buffered)
    # Target ~4 MiB of input per tile to amortize the ~0.35 us per-step overhead.
    target = max(row_align, (4 * 1024 * 1024) // (H * in_bytes))
    block_rows = min(target, max_by_vmem, 1024)
    block_rows = max(row_align, (block_rows // row_align) * row_align)
    # Never exceed the (alignment-padded) total row count.
    rows_aligned = ((rows + row_align - 1) // row_align) * row_align
    return min(block_rows, rows_aligned)


def rmsnorm(hidden_states, weight, eps=1e-6, *, block_rows=None):
    """hidden_states: (..., H); weight: (H,). Matches PyTorch RMSNorm.forward."""
    orig_shape = hidden_states.shape
    H = orig_shape[-1]
    x2d = hidden_states.reshape(-1, H)
    rows = x2d.shape[0]

    # Output dtype: promotion of weight dtype with input dtype (PyTorch semantics).
    out_dtype = jnp.promote_types(weight.dtype, hidden_states.dtype)
    in_bytes = jnp.dtype(hidden_states.dtype).itemsize
    out_bytes = jnp.dtype(out_dtype).itemsize
    vmem_cap = _vmem_capacity_bytes()

    if block_rows is None:
        block_rows = _pick_block_rows(rows, H, in_bytes, out_bytes, vmem_cap)

    # Ragged tail: pad rows up to a multiple of the tile, slice off afterwards.
    padded_rows = ((rows + block_rows - 1) // block_rows) * block_rows
    if padded_rows != rows:
        x2d = jnp.pad(x2d, ((0, padded_rows - rows), (0, 0)))

    w2d = weight.reshape(1, H)

    # Scoped VMEM sized to the double-buffered in+out tiles, with headroom,
    # never exceeding this chip's physical VMEM (64 MiB on v7x, 128 on v5e/v6e).
    block_bytes = 2 * block_rows * H * (in_bytes + out_bytes)
    vmem_limit = int(min(vmem_cap, max(48 << 20, block_bytes + (8 << 20))))

    kernel = functools.partial(_rmsnorm_kernel, eps=eps)
    out = pl.pallas_call(
        kernel,
        out_shape=jax.ShapeDtypeStruct((padded_rows, H), out_dtype),
        grid_spec=pltpu.PrefetchScalarGridSpec(
            num_scalar_prefetch=0,
            grid=(padded_rows // block_rows,),
            in_specs=[
                pl.BlockSpec((block_rows, H), lambda i: (i, 0)),
                pl.BlockSpec((1, H), lambda i: (0, 0)),
            ],
            out_specs=pl.BlockSpec((block_rows, H), lambda i: (i, 0)),
        ),
        compiler_params=pltpu.CompilerParams(
            dimension_semantics=("parallel",),   # row axis shards across TCs (v7x)
            vmem_limit_bytes=vmem_limit,
        ),
    )(x2d, w2d)

    if padded_rows != rows:
        out = out[:rows]
    return out.reshape(orig_shape[:-1] + (H,))


def rmsnorm_ref(hidden_states, weight, eps=1e-6):
    # Pure-JAX reference mirroring the PyTorch module.
    input_dtype = hidden_states.dtype
    x = hidden_states.astype(jnp.float32)
    var = jnp.mean(x * x, axis=-1, keepdims=True)
    x = x * jax.lax.rsqrt(var + eps)
    return weight * x.astype(input_dtype)


if __name__ == "__main__":
    key = jax.random.PRNGKey(0)
    batch, seq, hidden = 2, 8, 128
    x = jax.random.normal(key, (batch, seq, hidden), dtype=jnp.float32)
    # Deterministic parameter init: PyTorch initializes weight to ones.
    weight = jnp.ones((hidden,), dtype=jnp.float32)

    out = rmsnorm(x, weight, eps=1e-6)
    jax.block_until_ready(out)
    ref = rmsnorm_ref(x, weight, eps=1e-6)
    assert out.shape == ref.shape and out.dtype == ref.dtype
    assert jnp.allclose(out, ref, atol=1e-5, rtol=1e-5)

    # Ragged row count + bf16 input: exercises padding and dtype-promotion paths.
    x_bf16 = jax.random.normal(jax.random.PRNGKey(1), (3, 5, hidden),
                               dtype=jnp.bfloat16)
    out2 = rmsnorm(x_bf16, weight, eps=1e-6)
    jax.block_until_ready(out2)
    ref2 = rmsnorm_ref(x_bf16, weight, eps=1e-6)
    assert out2.shape == ref2.shape and out2.dtype == ref2.dtype
    assert jnp.allclose(out2, ref2, atol=1e-2, rtol=1e-2)

    print("KERNEL_OK")
</pallas_src>

<mosaic_0001>
module attributes {stable_mosaic.version = 11 : i64} {
  func.func @_rmsnorm_kernel(%arg0: i32, %arg1: memref<16x128xf32, #tpu.memory_space<vmem>>, %arg2: memref<1x128xf32, #tpu.memory_space<vmem>>, %arg3: memref<16x128xf32, #tpu.memory_space<vmem>>) attributes {dimension_semantics = [#tpu.dimension_semantics<parallel>], iteration_bounds = array<i64: 1>, scalar_prefetch = 0 : i64, scratch_operands = 0 : i64, tpu.core_type = #tpu.core_type<tc>, window_params = [{transform_indices = @transform_0, window_bounds = array<i64: 16, 128>}, {pipeline_mode = #tpu.pipeline_mode<synchronous>, transform_indices = @transform_1, window_bounds = array<i64: 1, 128>}, {transform_indices = @transform_2, window_bounds = array<i64: 16, 128>}]} {
    %c0 = arith.constant 0 : index
    %c0_0 = arith.constant 0 : index
    %0 = vector.load %arg1[%c0, %c0_0] : memref<16x128xf32, #tpu.memory_space<vmem>>, vector<16x128xf32>
    %1 = arith.mulf %0, %0 : vector<16x128xf32>
    %cst = arith.constant dense<0.000000e+00> : vector<16xf32>
    %2 = vector.multi_reduction <add>, %1, %cst [1] : vector<16x128xf32> to vector<16xf32>
    %3 = vector.shape_cast %2 : vector<16xf32> to vector<16x1xf32>
    %cst_1 = arith.constant 1.280000e+02 : f32
    %4 = vector.broadcast %cst_1 : f32 to vector<16x1xf32>
    %5 = arith.divf %3, %4 : vector<16x1xf32>
    %cst_2 = arith.constant 9.99999997E-7 : f32
    %6 = vector.broadcast %cst_2 : f32 to vector<16x1xf32>
    %7 = arith.addf %5, %6 : vector<16x1xf32>
    %8 = math.rsqrt %7 : vector<16x1xf32>
    %9 = vector.broadcast %8 : vector<16x1xf32> to vector<16x128xf32>
    %10 = arith.mulf %0, %9 : vector<16x128xf32>
    %c0_3 = arith.constant 0 : index
    %c0_4 = arith.constant 0 : index
    %11 = vector.load %arg2[%c0_3, %c0_4] : memref<1x128xf32, #tpu.memory_space<vmem>>, vector<1x128xf32>
    %12 = vector.broadcast %11 : vector<1x128xf32> to vector<16x128xf32>
    %13 = arith.mulf %12, %10 : vector<16x128xf32>
    %c0_5 = arith.constant 0 : index
    %c0_6 = arith.constant 0 : index
    %14 = vector.load %arg3[%c0_5, %c0_6] : memref<16x128xf32, #tpu.memory_space<vmem>>, vector<16x128xf32>
    tpu.vector_store %arg3[%c0_5, %c0_6], %13 {strides = array<i32>} : memref<16x128xf32, #tpu.memory_space<vmem>>, vector<16x128xf32>,
    return
  }
  func.func @transform_0(%arg0: i32) -> (i32, i32) {
    %c0_i32 = arith.constant 0 : i32
    %c0_i32_0 = arith.constant 0 : i32
    return %arg0, %c0_i32 : i32, i32
  }
  func.func @transform_1(%arg0: i32) -> (i32, i32) {
    %c0_i32 = arith.constant 0 : i32
    %c0_i32_0 = arith.constant 0 : i32
    %c0_i32_1 = arith.constant 0 : i32
    return %c0_i32, %c0_i32_0 : i32, i32
  }
  func.func @transform_2(%arg0: i32) -> (i32, i32) {
    %c0_i32 = arith.constant 0 : i32
    %c0_i32_0 = arith.constant 0 : i32
    return %arg0, %c0_i32 : i32, i32
  }
}

</mosaic_0001>

<llo_original>
// kernel: tpu_custom_call.1
$region0: #{tpu_custom_call.1}
  #allocation0 [shape = 'u32[]', space=smem, size = 0x4, offset = 0x4, fixed_abs, tag = 'smem constant byte address 0x4 - core index']
  #allocation1 [shape = 'u32[144,128]{1,0:T(1,128)}', space=vmem, size = 0x12000, scoped, tag = 'internal scratch']
  %s0 = inlined_call_operand.hbm [shape: f32[16,128], index: 0, kind: input, shape index: {}]
  %s1 = inlined_call_operand.vmem [shape: f32[1,128], index: 1, kind: input, shape index: {}]
  %s2 = inlined_call_operand.hbm [shape: f32[16,128], index: 2, kind: output, shape index: {}]
  %s3 = sld [smem:[#allocation0]]
  $region22: #{tpu_custom_call.1} parent=0
    _
  %s5 = ssub.s32 1, %s3
  %s6 = scalar_select 0, %s5, %s3
  $region1: #{tpu_custom_call.1} parent=0
    #allocation2 [shape = 'u8[8192]{0}', space=vmem, size = 0x2000, scoped, tag = 'input window, operand 0, single buffered']
    #allocation3 [shape = 's32[1]{0}', space=sflag, size = 0x4, scoped, tag = 'scoped memory for tpu_custom_call.1']
    #allocation4 [shape = 's32[1]{0}', space=sflag, size = 0x4, scoped, tag = 'scoped memory for tpu_custom_call.1']
    #allocation5 [shape = 'u8[8192]{0}', space=vmem, size = 0x2000, scoped, tag = 'output window, operand 0, single buffered']
    %7 = vsyncpa [#allocation3], 0
    %8 = vsyncpa [#allocation4], 0
    // Predicated region
    $region2: #{tpu_custom_call.1} parent=1 // pred_check
      _
    $region3: #{tpu_custom_call.1} parent=1 // pred_check_branch
      %10 = sbr.rel (0) target = $region5
    $region4: #{tpu_custom_call.1} parent=1 // pred_region
      %s12 = ssub.s32 256, 256
      %13 = vsyncadd [#allocation3], %s12
      %s14 = sshll.u32 [#allocation2], 4
      %s15 = int_to_ptr.vmem [resolvable:$true] %s14
      %20 = dma.hbm_to_vmem [thread:$0]  %s0, 256, %s15, [#allocation3], 128, 128, 8
    $region5: #{tpu_custom_call.1} parent=1 // pred_fallthru
      _
    // Predicated region
    $region6: #{tpu_custom_call.1} parent=1 // pred_check
      _
    $region7: #{tpu_custom_call.1} parent=1 // pred_check_branch
      %22 = sbr.rel (0) target = $region9
    $region8: #{tpu_custom_call.1} parent=1 // pred_region
      _
    $region9: #{tpu_custom_call.1} parent=1 // pred_fallthru
      _
    // Predicated region
    $region10: #{tpu_custom_call.1} parent=1 // pred_check
      _
    $region11: #{tpu_custom_call.1} parent=1 // pred_check_branch
      %24 = sbr.rel (0) target = $region13
    $region12: #{tpu_custom_call.1} parent=1 // pred_region
      %25 = dma.done [#allocation3], 256
    $region13: #{tpu_custom_call.1} parent=1 // pred_fallthru
      _
    %v26 = vld [vmem:[#allocation2] sm:$0xff]
    %v27 = vld [vmem:[#allocation2 + $0x8] sm:$0xff]
    %v28 = vmul.f32 %v26, %v26
    %v29 = vmul.f32 %v27, %v27
    %30 = vadd.xlane.f32.xlu0 %v28
    %v31 = vpop.xlane.xlu0 %30
    %32 = vadd.xlane.f32.xlu0 %v29
    %v33 = vpop.xlane.xlu0 %32
    %v34 = vrcp.pop 128.0
    %v35 = vmul.f32 %v31, %v34
    %v36 = vmul.f32 %v33, %v34
    %v37 = vadd.f32 %v35, 1e-06
    %v38 = vadd.f32 %v36, 1e-06
    %v39 = vrsqrt.pop %v37
    %v40 = vrsqrt.pop %v38
    %v41 = vmul.f32 %v26, %v39
    %v42 = vmul.f32 %v27, %v40
    %v43 = vld [vmem:[%s1] sm:$0x1]
    %v45 = vlaneseq
    %v46 = vshrl.u32 %v45, 7
    %v47 = vsub.s32 0, %v46
    %v48 = vrot.slane %v43, %v47
    %v50 = vmul.f32 %v48, %v41
    %v51 = vmul.f32 %v48, %v42
    %52 = vst [vmem:[#allocation5] sm:$0xff] %v50
    %53 = vst [vmem:[#allocation5 + $0x8] sm:$0xff] %v51
    // Predicated region
    $region14: #{tpu_custom_call.1} parent=1 // pred_check
      _
    $region15: #{tpu_custom_call.1} parent=1 // pred_check_branch
      %55 = sbr.rel (0) target = $region17
    $region16: #{tpu_custom_call.1} parent=1 // pred_region
      %s57 = ssub.s32 256, 256
      %58 = vsyncadd [#allocation4], %s57
      %s59 = sshll.u32 [#allocation5], 4
      %s60 = int_to_ptr.vmem [resolvable:$true] %s59
      %65 = dma.vmem_to_hbm [thread:$0]  %s60, 256, %s2, [#allocation4], 128, 128, 8
    $region17: #{tpu_custom_call.1} parent=1 // pred_fallthru
      _
    // Predicated region
    $region18: #{tpu_custom_call.1} parent=1 // pred_check
      _
    $region19: #{tpu_custom_call.1} parent=1 // pred_check_branch
      %67 = sbr.rel (0) target = $region21
    $region20: #{tpu_custom_call.1} parent=1 // pred_region
      %68 = dma.done [#allocation4], 256
    $region21: #{tpu_custom_call.1} parent=1 // pred_fallthru
      _
    %69 = vsyncpa [#allocation3], 1
    %70 = vsyncpa [#allocation4], 1

</llo_original>
